<compile_context>
chip_gen: v6e
topology: v6e:2x2x1
jax: 0.10.0
libtpu: 0.0.40
codegen_flags: <defaults>
</compile_context>

<pallas_src>
import jax
import jax.numpy as jnp
from jax.experimental import pallas as pl
from jax.experimental.pallas import tpu as pltpu


def _ranknet_kernel(x1_ref, x2_ref,
                    w1_ref, b1_ref, w2_ref, b2_ref,
                    w3_ref, b3_ref, w4_ref, b4_ref,
                    out_ref):
    """sigmoid(mlp(x1) - mlp(x2)) for one batch tile, written lane-dense."""
    t = x1_ref.shape[0]

    # Stack both inputs along the sublane axis: each layer's weights are then
    # pushed to the MXU once per tile and reused for x1 and x2.
    x = jnp.concatenate([x1_ref[...], x2_ref[...]], axis=0)            # (2t, F)

    # Linear(F, 32) + ReLU   (Dropout = identity at inference)
    h = jnp.dot(x, w1_ref[...], preferred_element_type=jnp.float32)
    h = jnp.maximum(h + b1_ref[...], 0.0)
    # Linear(32, 16) + ReLU
    h = jnp.dot(h, w2_ref[...], preferred_element_type=jnp.float32)
    h = jnp.maximum(h + b2_ref[...], 0.0)
    # Linear(16, 8) + ReLU
    h = jnp.dot(h, w3_ref[...], preferred_element_type=jnp.float32)
    h = jnp.maximum(h + b3_ref[...], 0.0)

    # Final Linear(8, 1): VPU multiply + lane reduce (skip an N=1 MXU dot).
    w4 = w4_ref[...].astype(jnp.float32)                               # (1, 8)
    s = jnp.sum(h * w4, axis=-1, keepdims=True) + b4_ref[...]          # (2t, 1)

    diff = s[:t, :] - s[t:, :]                                         # (t, 1)
    # Lane-dense store: one (1, t) row per grid step (transpose is an XLU op).
    out_ref[...] = jnp.transpose(jax.nn.sigmoid(diff)).astype(out_ref.dtype)


def _round_up(a, m):
    return ((a + m - 1) // m) * m


def ranknet_forward(x1, x2, params, *, batch_tile=512,
                    stream_dtype=jnp.float32, vmem_limit_bytes=None):
    """Pallas wrapper: 1-D grid over batch tiles; weights/biases replicated.

    batch_tile is the main tuning knob (512-2048 is a good range on real
    batches).  Inputs are padded to a sublane/lane-friendly tile and the pad
    rows are sliced off the result.
    """
    (w1, b1), (w2, b2), (w3, b3), (w4, b4) = params
    B, F = x1.shape
    assert x2.shape == (B, F)

    # Pick a tile: either the whole (8-padded) batch, or a multiple of 128 so
    # both the sublane input blocks and the lane-dense output blocks are
    # aligned when the grid has multiple steps.
    b_pad8 = _round_up(B, 8)
    if batch_tile >= b_pad8:
        tile = b_pad8
    else:
        tile = max(128, _round_up(batch_tile, 128))
        if tile >= b_pad8:
            tile = b_pad8
    Bp = _round_up(B, tile)
    n_tiles = Bp // tile

    if Bp != B:
        pad = Bp - B
        x1 = jnp.pad(x1, ((0, pad), (0, 0)))
        x2 = jnp.pad(x2, ((0, pad), (0, 0)))

    # Stream x and weights at stream_dtype (bf16 halves HBM traffic on
    # v6e/v7x); biases stay f32 and all elementwise math is f32 (v5e-safe).
    x1 = x1.astype(stream_dtype)
    x2 = x2.astype(stream_dtype)
    w1c = w1.astype(stream_dtype)
    w2c = w2.astype(stream_dtype)
    w3c = w3.astype(stream_dtype)
    w4_row = jnp.transpose(w4).astype(stream_dtype)                    # (1, 8)
    b1c, b2c, b3c, b4c = (b.astype(jnp.float32) for b in (b1, b2, b3, b4))

    def rep_spec(shape):
        return pl.BlockSpec(shape, lambda i: (0, 0))

    in_specs = [
        pl.BlockSpec((tile, F), lambda i: (i, 0)),   # x1 tile
        pl.BlockSpec((tile, F), lambda i: (i, 0)),   # x2 tile
        rep_spec(w1c.shape), rep_spec(b1c.shape),
        rep_spec(w2c.shape), rep_spec(b2c.shape),
        rep_spec(w3c.shape), rep_spec(b3c.shape),
        rep_spec(w4_row.shape), rep_spec(b4c.shape),
    ]
    # Lane-dense output: one (1, tile) row block per grid step.
    out_specs = pl.BlockSpec((1, tile), lambda i: (0, i))

    out_row = pl.pallas_call(
        _ranknet_kernel,
        out_shape=jax.ShapeDtypeStruct((1, Bp), jnp.float32),
        grid_spec=pltpu.PrefetchScalarGridSpec(
            num_scalar_prefetch=0,
            grid=(n_tiles,),
            in_specs=in_specs,
            out_specs=out_specs,
        ),
        compiler_params=pltpu.CompilerParams(
            dimension_semantics=("parallel",),     # megacore / v7x 2-TC sharding
            vmem_limit_bytes=vmem_limit_bytes,     # raise if using huge tiles on v7x
        ),
    )(x1, x2, w1c, b1c, w2c, b2c, w3c, b3c, w4_row, b4c)

    return out_row.reshape(Bp, 1)[:B]


def init_params(key, n_features):
    """Deterministic init matching nn.Linear's U(-1/sqrt(in), 1/sqrt(in))."""
    dims = [(n_features, 32), (32, 16), (16, 8), (8, 1)]
    params = []
    for (fan_in, fan_out) in dims:
        key, kw, kb = jax.random.split(key, 3)
        bound = 1.0 / jnp.sqrt(float(fan_in))
        w = jax.random.uniform(kw, (fan_in, fan_out), jnp.float32, -bound, bound)
        b = jax.random.uniform(kb, (1, fan_out), jnp.float32, -bound, bound)
        params.append((w, b))
    return params


def _reference_forward(x1, x2, params):
    """Pure-JAX reference for a sanity check."""
    def mlp(x):
        h = x
        for i, (w, b) in enumerate(params):
            h = h @ w + b
            if i < len(params) - 1:
                h = jnp.maximum(h, 0.0)
        return h
    return jax.nn.sigmoid(mlp(x1) - mlp(x2))


if __name__ == "__main__":
    n_features = 32
    batch = 16

    key = jax.random.PRNGKey(0)
    key, k1, k2 = jax.random.split(key, 3)
    x1 = jax.random.normal(k1, (batch, n_features), jnp.float32)
    x2 = jax.random.normal(k2, (batch, n_features), jnp.float32)
    params = init_params(key, n_features)

    ref = _reference_forward(x1, x2, params)

    # f32 path.
    out = jax.block_until_ready(ranknet_forward(x1, x2, params))
    assert out.shape == (batch, 1)
    assert jnp.allclose(out, ref, atol=1e-4, rtol=1e-4), "f32 mismatch vs reference"

    # bf16-streaming path (HBM-bandwidth optimization for v6e / v7x).
    out_bf16 = jax.block_until_ready(
        ranknet_forward(x1, x2, params, stream_dtype=jnp.bfloat16))
    assert out_bf16.shape == (batch, 1)
    assert jnp.allclose(out_bf16, ref, atol=5e-2), "bf16 mismatch vs reference"

    # Ragged, multi-tile path (exercises batch padding + 128-lane output blocks).
    b2n, f2 = 200, 48
    key, k3, k4, k5 = jax.random.split(key, 4)
    xa = jax.random.normal(k3, (b2n, f2), jnp.float32)
    xb = jax.random.normal(k4, (b2n, f2), jnp.float32)
    params2 = init_params(k5, f2)
    out2 = jax.block_until_ready(ranknet_forward(xa, xb, params2, batch_tile=128))
    ref2 = _reference_forward(xa, xb, params2)
    assert out2.shape == (b2n, 1)
    assert jnp.allclose(out2, ref2, atol=1e-4, rtol=1e-4), "ragged mismatch vs reference"

    print("KERNEL_OK")
</pallas_src>

<mosaic_0001>
module attributes {stable_mosaic.version = 11 : i64} {
  func.func @_ranknet_kernel(%arg0: i32, %arg1: memref<16x32xf32, #tpu.memory_space<vmem>>, %arg2: memref<16x32xf32, #tpu.memory_space<vmem>>, %arg3: memref<32x32xf32, #tpu.memory_space<vmem>>, %arg4: memref<1x32xf32, #tpu.memory_space<vmem>>, %arg5: memref<32x16xf32, #tpu.memory_space<vmem>>, %arg6: memref<1x16xf32, #tpu.memory_space<vmem>>, %arg7: memref<16x8xf32, #tpu.memory_space<vmem>>, %arg8: memref<1x8xf32, #tpu.memory_space<vmem>>, %arg9: memref<1x8xf32, #tpu.memory_space<vmem>>, %arg10: memref<1x1xf32, #tpu.memory_space<vmem>>, %arg11: memref<1x16xf32, #tpu.memory_space<vmem>>) attributes {dimension_semantics = [#tpu.dimension_semantics<parallel>], iteration_bounds = array<i64: 1>, scalar_prefetch = 0 : i64, scratch_operands = 0 : i64, tpu.core_type = #tpu.core_type<tc>, window_params = [{transform_indices = @transform_0, window_bounds = array<i64: 16, 32>}, {transform_indices = @transform_1, window_bounds = array<i64: 16, 32>}, {pipeline_mode = #tpu.pipeline_mode<synchronous>, transform_indices = @transform_2, window_bounds = array<i64: 32, 32>}, {pipeline_mode = #tpu.pipeline_mode<synchronous>, transform_indices = @transform_3, window_bounds = array<i64: 1, 32>}, {pipeline_mode = #tpu.pipeline_mode<synchronous>, transform_indices = @transform_4, window_bounds = array<i64: 32, 16>}, {pipeline_mode = #tpu.pipeline_mode<synchronous>, transform_indices = @transform_5, window_bounds = array<i64: 1, 16>}, {pipeline_mode = #tpu.pipeline_mode<synchronous>, transform_indices = @transform_6, window_bounds = array<i64: 16, 8>}, {pipeline_mode = #tpu.pipeline_mode<synchronous>, transform_indices = @transform_7, window_bounds = array<i64: 1, 8>}, {pipeline_mode = #tpu.pipeline_mode<synchronous>, transform_indices = @transform_8, window_bounds = array<i64: 1, 8>}, {pipeline_mode = #tpu.pipeline_mode<synchronous>, transform_indices = @transform_9, window_bounds = array<i64: 1, 1>}, {transform_indices = @transform_10, window_bounds = array<i64: 1, 16>}]} {
    %c0 = arith.constant 0 : index
    %c0_0 = arith.constant 0 : index
    %0 = vector.load %arg1[%c0, %c0_0] : memref<16x32xf32, #tpu.memory_space<vmem>>, vector<16x32xf32>
    %c0_1 = arith.constant 0 : index
    %c0_2 = arith.constant 0 : index
    %1 = vector.load %arg2[%c0_1, %c0_2] : memref<16x32xf32, #tpu.memory_space<vmem>>, vector<16x32xf32>
    %2 = tpu.concatenate %0, %1 in 0 : vector<16x32xf32>, vector<16x32xf32> -> vector<32x32xf32>
    %c0_3 = arith.constant 0 : index
    %c0_4 = arith.constant 0 : index
    %3 = vector.load %arg3[%c0_3, %c0_4] : memref<32x32xf32, #tpu.memory_space<vmem>>, vector<32x32xf32>
    %cst = arith.constant dense<0.000000e+00> : vector<32x32xf32>
    %4 = tpu.matmul %2, %3, %cst {dimension_numbers = #tpu.dot_dimension_numbers<[1], [0], [0], [1], [0, 0, 1, 1], [], []>} : vector<32x32xf32>, vector<32x32xf32>, vector<32x32xf32> -> vector<32x32xf32>
    %c0_5 = arith.constant 0 : index
    %c0_6 = arith.constant 0 : index
    %5 = vector.load %arg4[%c0_5, %c0_6] : memref<1x32xf32, #tpu.memory_space<vmem>>, vector<1x32xf32>
    %6 = vector.broadcast %5 : vector<1x32xf32> to vector<32x32xf32>
    %7 = arith.addf %4, %6 : vector<32x32xf32>
    %cst_7 = arith.constant 0.000000e+00 : f32
    %8 = vector.broadcast %cst_7 : f32 to vector<32x32xf32>
    %9 = arith.maximumf %7, %8 : vector<32x32xf32>
    %c0_8 = arith.constant 0 : index
    %c0_9 = arith.constant 0 : index
    %10 = vector.load %arg5[%c0_8, %c0_9] : memref<32x16xf32, #tpu.memory_space<vmem>>, vector<32x16xf32>
    %cst_10 = arith.constant dense<0.000000e+00> : vector<32x16xf32>
    %11 = tpu.matmul %9, %10, %cst_10 {dimension_numbers = #tpu.dot_dimension_numbers<[1], [0], [0], [1], [0, 0, 1, 1], [], []>} : vector<32x32xf32>, vector<32x16xf32>, vector<32x16xf32> -> vector<32x16xf32>
    %c0_11 = arith.constant 0 : index
    %c0_12 = arith.constant 0 : index
    %12 = vector.load %arg6[%c0_11, %c0_12] : memref<1x16xf32, #tpu.memory_space<vmem>>, vector<1x16xf32>
    %13 = vector.broadcast %12 : vector<1x16xf32> to vector<32x16xf32>
    %14 = arith.addf %11, %13 : vector<32x16xf32>
    %cst_13 = arith.constant 0.000000e+00 : f32
    %15 = vector.broadcast %cst_13 : f32 to vector<32x16xf32>
    %16 = arith.maximumf %14, %15 : vector<32x16xf32>
    %c0_14 = arith.constant 0 : index
    %c0_15 = arith.constant 0 : index
    %17 = vector.load %arg7[%c0_14, %c0_15] : memref<16x8xf32, #tpu.memory_space<vmem>>, vector<16x8xf32>
    %cst_16 = arith.constant dense<0.000000e+00> : vector<32x8xf32>
    %18 = tpu.matmul %16, %17, %cst_16 {dimension_numbers = #tpu.dot_dimension_numbers<[1], [0], [0], [1], [0, 0, 1, 1], [], []>} : vector<32x16xf32>, vector<16x8xf32>, vector<32x8xf32> -> vector<32x8xf32>
    %c0_17 = arith.constant 0 : index
    %c0_18 = arith.constant 0 : index
    %19 = vector.load %arg8[%c0_17, %c0_18] : memref<1x8xf32, #tpu.memory_space<vmem>>, vector<1x8xf32>
    %20 = vector.broadcast %19 : vector<1x8xf32> to vector<32x8xf32>
    %21 = arith.addf %18, %20 : vector<32x8xf32>
    %cst_19 = arith.constant 0.000000e+00 : f32
    %22 = vector.broadcast %cst_19 : f32 to vector<32x8xf32>
    %23 = arith.maximumf %21, %22 : vector<32x8xf32>
    %c0_20 = arith.constant 0 : index
    %c0_21 = arith.constant 0 : index
    %24 = vector.load %arg9[%c0_20, %c0_21] : memref<1x8xf32, #tpu.memory_space<vmem>>, vector<1x8xf32>
    %25 = vector.broadcast %24 : vector<1x8xf32> to vector<32x8xf32>
    %26 = arith.mulf %23, %25 : vector<32x8xf32>
    %cst_22 = arith.constant dense<0.000000e+00> : vector<32xf32>
    %27 = vector.multi_reduction <add>, %26, %cst_22 [1] : vector<32x8xf32> to vector<32xf32>
    %28 = vector.shape_cast %27 : vector<32xf32> to vector<32x1xf32>
    %c0_23 = arith.constant 0 : index
    %c0_24 = arith.constant 0 : index
    %29 = vector.load %arg10[%c0_23, %c0_24] : memref<1x1xf32, #tpu.memory_space<vmem>>, vector<1x1xf32>
    %30 = vector.broadcast %29 : vector<1x1xf32> to vector<32x1xf32>
    %31 = arith.addf %28, %30 : vector<32x1xf32>
    %32 = vector.extract_strided_slice %31 {offsets = [0, 0], sizes = [16, 1], strides = [1, 1]} : vector<32x1xf32> to vector<16x1xf32>
    %33 = vector.extract_strided_slice %31 {offsets = [16, 0], sizes = [16, 1], strides = [1, 1]} : vector<32x1xf32> to vector<16x1xf32>
    %34 = arith.subf %32, %33 : vector<16x1xf32>
    %35 = arith.negf %34 : vector<16x1xf32>
    %36 = math.exp %35 : vector<16x1xf32>
    %cst_25 = arith.constant 1.000000e+00 : f32
    %37 = vector.broadcast %cst_25 : f32 to vector<16x1xf32>
    %38 = arith.addf %37, %36 : vector<16x1xf32>
    %39 = arith.divf %37, %38 : vector<16x1xf32>
    %40 = tpu.transpose %39, [1, 0] : vector<16x1xf32> -> vector<1x16xf32>
    %c0_26 = arith.constant 0 : index
    %c0_27 = arith.constant 0 : index
    %41 = vector.load %arg11[%c0_26, %c0_27] : memref<1x16xf32, #tpu.memory_space<vmem>>, vector<1x16xf32>
    tpu.vector_store %arg11[%c0_26, %c0_27], %40 {strides = array<i32>} : memref<1x16xf32, #tpu.memory_space<vmem>>, vector<1x16xf32>,
    return
  }
  func.func @transform_0(%arg0: i32) -> (i32, i32) {
    %c0_i32 = arith.constant 0 : i32
    %c0_i32_0 = arith.constant 0 : i32
    return %arg0, %c0_i32 : i32, i32
  }
  func.func @transform_1(%arg0: i32) -> (i32, i32) {
    %c0_i32 = arith.constant 0 : i32
    %c0_i32_0 = arith.constant 0 : i32
    return %arg0, %c0_i32 : i32, i32
  }
  func.func @transform_2(%arg0: i32) -> (i32, i32) {
    %c0_i32 = arith.constant 0 : i32
    %c0_i32_0 = arith.constant 0 : i32
    %c0_i32_1 = arith.constant 0 : i32
    return %c0_i32, %c0_i32_0 : i32, i32
  }
  func.func @transform_3(%arg0: i32) -> (i32, i32) {
    %c0_i32 = arith.constant 0 : i32
    %c0_i32_0 = arith.constant 0 : i32
    %c0_i32_1 = arith.constant 0 : i32
    return %c0_i32, %c0_i32_0 : i32, i32
  }
  func.func @transform_4(%arg0: i32) -> (i32, i32) {
    %c0_i32 = arith.constant 0 : i32
    %c0_i32_0 = arith.constant 0 : i32
    %c0_i32_1 = arith.constant 0 : i32
    return %c0_i32, %c0_i32_0 : i32, i32
  }
  func.func @transform_5(%arg0: i32) -> (i32, i32) {
    %c0_i32 = arith.constant 0 : i32
    %c0_i32_0 = arith.constant 0 : i32
    %c0_i32_1 = arith.constant 0 : i32
    return %c0_i32, %c0_i32_0 : i32, i32
  }
  func.func @transform_6(%arg0: i32) -> (i32, i32) {
    %c0_i32 = arith.constant 0 : i32
    %c0_i32_0 = arith.constant 0 : i32
    %c0_i32_1 = arith.constant 0 : i32
    return %c0_i32, %c0_i32_0 : i32, i32
  }
  func.func @transform_7(%arg0: i32) -> (i32, i32) {
    %c0_i32 = arith.constant 0 : i32
    %c0_i32_0 = arith.constant 0 : i32
    %c0_i32_1 = arith.constant 0 : i32
    return %c0_i32, %c0_i32_0 : i32, i32
  }
  func.func @transform_8(%arg0: i32) -> (i32, i32) {
    %c0_i32 = arith.constant 0 : i32
    %c0_i32_0 = arith.constant 0 : i32
    %c0_i32_1 = arith.constant 0 : i32
    return %c0_i32, %c0_i32_0 : i32, i32
  }
  func.func @transform_9(%arg0: i32) -> (i32, i32) {
    %c0_i32 = arith.constant 0 : i32
    %c0_i32_0 = arith.constant 0 : i32
    %c0_i32_1 = arith.constant 0 : i32
    return %c0_i32, %c0_i32_0 : i32, i32
  }
  func.func @transform_10(%arg0: i32) -> (i32, i32) {
    %c0_i32 = arith.constant 0 : i32
    %c0_i32_0 = arith.constant 0 : i32
    return %c0_i32, %arg0 : i32, i32
  }
}

</mosaic_0001>

<llo_original>
// kernel: tpu_custom_call.1
$region0: #{tpu_custom_call.1}
  #allocation0 [shape = 'u32[]', space=smem, size = 0x4, offset = 0x4, fixed_abs, tag = 'smem constant byte address 0x4 - core index']
  #allocation1 [shape = 'u32[144,128]{1,0:T(1,128)}', space=vmem, size = 0x12000, scoped, tag = 'internal scratch']
  #allocation2 [shape = 'f32[1,1]{1,0:T(1,128)S(1)}', space=vmem, size = 0x200, scoped, tag = 'scoped memory for tpu_custom_call.1']
  %s0 = inlined_call_operand.vmem [shape: f32[16,32], index: 0, kind: input, shape index: {}]
  %s1 = inlined_call_operand.hbm [shape: f32[16,32], index: 1, kind: input, shape index: {}]
  %s2 = inlined_call_operand.vmem [shape: f32[32,32], index: 2, kind: input, shape index: {}]
  %s3 = inlined_call_operand.vmem [shape: f32[1,32], index: 3, kind: input, shape index: {}]
  %s4 = inlined_call_operand.vmem [shape: f32[32,16], index: 4, kind: input, shape index: {}]
  %s5 = inlined_call_operand.vmem [shape: f32[1,16], index: 5, kind: input, shape index: {}]
  %s6 = inlined_call_operand.vmem [shape: f32[16,8], index: 6, kind: input, shape index: {}]
  %s7 = inlined_call_operand.vmem [shape: f32[1,8], index: 7, kind: input, shape index: {}]
  %s8 = inlined_call_operand.vmem [shape: f32[1,8], index: 8, kind: input, shape index: {}]
  %s9 = inlined_call_operand.<no memory space> [shape: f32[1,1], index: 9, kind: input, shape index: {}]
  %s10 = inlined_call_operand.hbm [shape: f32[1,16], index: 10, kind: output, shape index: {}]
  %s11 = sld [smem:[#allocation0]]
  $region54: #{tpu_custom_call.1} parent=0
    _
  %s13 = ssub.s32 1, %s11
  %s14 = scalar_select 0, %s13, %s11
  %v15 = vstv %s9
  %16 = vst [vmem:[#allocation2] sm:$0x1] %v15
  $region1: #{tpu_custom_call.1} parent=0
    #allocation3 [shape = 'u8[8192]{0}', space=vmem, size = 0x2000, scoped, tag = 'input window, operand 1, single buffered']
    #allocation4 [shape = 's32[1]{0}', space=sflag, size = 0x4, scoped, tag = 'scoped memory for tpu_custom_call.1']
    #allocation5 [shape = 's32[1]{0}', space=sflag, size = 0x4, scoped, tag = 'scoped memory for tpu_custom_call.1']
    #allocation6 [shape = 'u8[512]{0}', space=vmem, size = 0x400, scoped, tag = 'output window, operand 0, single buffered']
    %17 = vsyncpa [#allocation4], 0
    %18 = vsyncpa [#allocation5], 0
    // Predicated region
    $region2: #{tpu_custom_call.1} parent=1 // pred_check
      _
    $region3: #{tpu_custom_call.1} parent=1 // pred_check_branch
      %20 = sbr.rel (0) target = $region5
    $region4: #{tpu_custom_call.1} parent=1 // pred_region
      _
    $region5: #{tpu_custom_call.1} parent=1 // pred_fallthru
      _
    // Predicated region
    $region6: #{tpu_custom_call.1} parent=1 // pred_check
      _
    $region7: #{tpu_custom_call.1} parent=1 // pred_check_branch
      %22 = sbr.rel (0) target = $region9
    $region8: #{tpu_custom_call.1} parent=1 // pred_region
      %s24 = ssub.s32 256, 256
      %25 = vsyncadd [#allocation4], %s24
      %s26 = sshll.u32 [#allocation3], 4
      %s27 = int_to_ptr.vmem [resolvable:$true] %s26
      %32 = dma.hbm_to_vmem [thread:$0]  %s1, 256, %s27, [#allocation4], 128, 128, 8
    $region9: #{tpu_custom_call.1} parent=1 // pred_fallthru
      _
    // Predicated region
    $region10: #{tpu_custom_call.1} parent=1 // pred_check
      _
    $region11: #{tpu_custom_call.1} parent=1 // pred_check_branch
      %34 = sbr.rel (0) target = $region13
    $region12: #{tpu_custom_call.1} parent=1 // pred_region
      _
    $region13: #{tpu_custom_call.1} parent=1 // pred_fallthru
      _
    // Predicated region
    $region14: #{tpu_custom_call.1} parent=1 // pred_check
      _
    $region15: #{tpu_custom_call.1} parent=1 // pred_check_branch
      %36 = sbr.rel (0) target = $region17
    $region16: #{tpu_custom_call.1} parent=1 // pred_region
      _
    $region17: #{tpu_custom_call.1} parent=1 // pred_fallthru
      _
    // Predicated region
    $region18: #{tpu_custom_call.1} parent=1 // pred_check
      _
    $region19: #{tpu_custom_call.1} parent=1 // pred_check_branch
      %38 = sbr.rel (0) target = $region21
    $region20: #{tpu_custom_call.1} parent=1 // pred_region
      _
    $region21: #{tpu_custom_call.1} parent=1 // pred_fallthru
      _
    // Predicated region
    $region22: #{tpu_custom_call.1} parent=1 // pred_check
      _
    $region23: #{tpu_custom_call.1} parent=1 // pred_check_branch
      %40 = sbr.rel (0) target = $region25
    $region24: #{tpu_custom_call.1} parent=1 // pred_region
      _
    $region25: #{tpu_custom_call.1} parent=1 // pred_fallthru
      _
    // Predicated region
    $region26: #{tpu_custom_call.1} parent=1 // pred_check
      _
    $region27: #{tpu_custom_call.1} parent=1 // pred_check_branch
      %42 = sbr.rel (0) target = $region29
    $region28: #{tpu_custom_call.1} parent=1 // pred_region
      _
    $region29: #{tpu_custom_call.1} parent=1 // pred_fallthru
      _
    // Predicated region
    $region30: #{tpu_custom_call.1} parent=1 // pred_check
      _
    $region31: #{tpu_custom_call.1} parent=1 // pred_check_branch
      %44 = sbr.rel (0) target = $region33
    $region32: #{tpu_custom_call.1} parent=1 // pred_region
      _
    $region33: #{tpu_custom_call.1} parent=1 // pred_fallthru
      _
    // Predicated region
    $region34: #{tpu_custom_call.1} parent=1 // pred_check
      _
    $region35: #{tpu_custom_call.1} parent=1 // pred_check_branch
      %46 = sbr.rel (0) target = $region37
    $region36: #{tpu_custom_call.1} parent=1 // pred_region
      _
    $region37: #{tpu_custom_call.1} parent=1 // pred_fallthru
      _
    // Predicated region
    $region38: #{tpu_custom_call.1} parent=1 // pred_check
      _
    $region39: #{tpu_custom_call.1} parent=1 // pred_check_branch
      %48 = sbr.rel (0) target = $region41
    $region40: #{tpu_custom_call.1} parent=1 // pred_region
      _
    $region41: #{tpu_custom_call.1} parent=1 // pred_fallthru
      _
    // Predicated region
    $region42: #{tpu_custom_call.1} parent=1 // pred_check
      _
    $region43: #{tpu_custom_call.1} parent=1 // pred_check_branch
      %50 = sbr.rel (0) target = $region45
    $region44: #{tpu_custom_call.1} parent=1 // pred_region
      %51 = dma.done [#allocation4], 256
    $region45: #{tpu_custom_call.1} parent=1 // pred_fallthru
      _
    %v52 = vld [vmem:[%s0] sm:$0xff]
    %v53 = vld [vmem:[%s0 + $0x8] sm:$0xff]
    %v54 = vld [vmem:[#allocation3] sm:$0xff]
    %v55 = vld [vmem:[#allocation3 + $0x8] sm:$0xff]
    %v56 = vld [vmem:[%s2] sm:$0xff]
    %v57 = vld [vmem:[%s2 + $0x8] sm:$0xff]
    %v58 = vld [vmem:[%s2 + $0x10] sm:$0xff]
    %v59 = vld [vmem:[%s2 + $0x18] sm:$0xff]
    %v60 = vld [vmem:[%s3] sm:$0x1]
    %v62 = vlaneseq
    %v63 = vshrl.u32 %v62, 7
    %v64 = vsub.s32 0, %v63
    %v65 = vrot.slane %v60, %v64
    %vm67 = vcmask 261120
    %v69 = vsel %vm67, %v52, 0
    %v72 = vsel %vm67, %v53, 0
    %v75 = vsel %vm67, %v54, 0
    %v78 = vsel %vm67, %v55, 0
    %80 = vmatprep.subr.mxu0 0.0
    %81 = vmatpush1.msra.mxu0 0.0
    %82 = vmatprep.subr.mxu0 0.0
    %83 = vmatpush1.msra.mxu0 0.0
    %84 = vmatprep.subr.mxu0 0.0
    %85 = vmatpush1.msra.mxu0 0.0
    %86 = vmatprep.subr.mxu0 0.0
    %87 = vmatpush1.msra.mxu0 0.0
    %88 = vmatprep.subr.mxu0 0.0
    %89 = vmatpush1.msra.mxu0 0.0
    %90 = vmatprep.subr.mxu0 0.0
    %91 = vmatpush1.msra.mxu0 0.0
    %92 = vmatprep.subr.mxu0 0.0
    %93 = vmatpush1.msra.mxu0 0.0
    %94 = vmatprep.subr.mxu0 0.0
    %95 = vmatpush1.msra.mxu0 0.0
    %96 = vmatprep.subr.mxu0 0.0
    %97 = vmatpush1.msra.mxu0 0.0
    %98 = vmatprep.subr.mxu0 0.0
    %99 = vmatpush1.msra.mxu0 0.0
    %100 = vmatprep.subr.mxu0 0.0
    %101 = vmatpush1.msra.mxu0 0.0
    %102 = vmatprep.subr.mxu0 0.0
    %103 = vmatpush1.msra.mxu0 0.0
    %104 = vmatprep.subr.mxu0 0.0
    %105 = vmatpush1.msra.mxu0 %v59
    %106 = vmatprep.subr.mxu0 0.0
    %107 = vmatpush1.msra.mxu0 %v58
    %108 = vmatprep.subr.mxu0 0.0
    %109 = vmatpush1.msra.mxu0 %v57
    %110 = vmatprep.subr.mxu0 0.0
    %111 = vmatpush1.msra.mxu0 %v56
    %112 = vmatprep.subr.mxu0 0.0
    %113 = vmatpush2.msra.mxu0 0.0
    %114 = vmatprep.subr.mxu0 0.0
    %115 = vmatpush2.msra.mxu0 0.0
    %116 = vmatprep.subr.mxu0 0.0
    %117 = vmatpush2.msra.mxu0 0.0
    %118 = vmatprep.subr.mxu0 0.0
    %119 = vmatpush2.msra.mxu0 0.0
    %120 = vmatprep.subr.mxu0 0.0
    %121 = vmatpush2.msra.mxu0 0.0
    %122 = vmatprep.subr.mxu0 0.0
    %123 = vmatpush2.msra.mxu0 0.0
    %124 = vmatprep.subr.mxu0 0.0
    %125 = vmatpush2.msra.mxu0 0.0
    %126 = vmatprep.subr.mxu0 0.0
    %127 = vmatpush2.msra.mxu0 0.0
    %128 = vmatprep.subr.mxu0 0.0
    %129 = vmatpush2.msra.mxu0 0.0
    %130 = vmatprep.subr.mxu0 0.0
    %131 = vmatpush2.msra.mxu0 0.0
    %132 = vmatprep.subr.mxu0 0.0
    %133 = vmatpush2.msra.mxu0 0.0
    %134 = vmatprep.subr.mxu0 0.0
    %135 = vmatpush2.msra.mxu0 0.0
    %136 = vmatprep.subr.mxu0 0.0
    %137 = vmatpush2.msra.mxu0 0.0
    %138 = vmatprep.subr.mxu0 0.0
    %139 = vmatpush2.msra.mxu0 0.0
    %140 = vmatprep.subr.mxu0 0.0
    %141 = vmatpush2.msra.mxu0 0.0
    %142 = vmatprep.subr.mxu0 0.0
    %143 = vmatpush2.msra.mxu0 0.0
    %144 = vmatprep.mubr.f32.mxu0 0.0
    %145 = vmatmul.mubr.f32.gmra.mxu0 %v69
    %v146 = vpop.f32.mrf.mxu0
    %v147 = vadd.f32 %v65, %v146
    %v148 = vpop.f32.mrf.mxu0
    %149 = vmatprep.mubr.f32.mxu0 0.0
    %150 = vmatmul.mubr.f32.gmra.mxu0 %v72
    %v151 = vpop.f32.mrf.mxu0
    %v152 = vadd.f32 %v65, %v151
    %v153 = vpop.f32.mrf.mxu0
    %154 = vmatprep.mubr.f32.mxu0 0.0
    %155 = vmatmul.mubr.f32.gmra.mxu0 %v75
    %v156 = vpop.f32.mrf.mxu0
    %v157 = vadd.f32 %v65, %v156
    %v158 = vpop.f32.mrf.mxu0
    %159 = vmatprep.mubr.f32.mxu0 0.0
    %160 = vmatmul.mubr.f32.gmra.mxu0 %v78
    %v161 = vpop.f32.mrf.mxu0
    %v162 = vadd.f32 %v65, %v161
    %v163 = vpop.f32.mrf.mxu0
    %164 = vdwg.mxu0
    %v165 = vmax.f32 %v147, 0.0
    %v166 = vmax.f32 %v152, 0.0
    %v167 = vmax.f32 %v157, 0.0
    %v168 = vmax.f32 %v162, 0.0
    %v169 = vld [vmem:[%s4] sm:$0xff]
    %v170 = vld [vmem:[%s4 + $0x8] sm:$0xff]
    %v171 = vld [vmem:[%s4 + $0x10] sm:$0xff]
    %v172 = vld [vmem:[%s4 + $0x18] sm:$0xff]
    %v173 = vld [vmem:[%s5] sm:$0x1]
    %v175 = vlaneseq
    %v176 = vshrl.u32 %v175, 7
    %v177 = vsub.s32 0, %v176
    %v178 = vrot.slane %v173, %v177
    %v181 = vsel %vm67, %v165, 0
    %v184 = vsel %vm67, %v166, 0
    %v187 = vsel %vm67, %v167, 0
    %v190 = vsel %vm67, %v168, 0
    %192 = vmatprep.subr.mxu0 0.0
    %193 = vmatpush1.msra.mxu0 0.0
    %194 = vmatprep.subr.mxu0 0.0
    %195 = vmatpush1.msra.mxu0 0.0
    %196 = vmatprep.subr.mxu0 0.0
    %197 = vmatpush1.msra.mxu0 0.0
    %198 = vmatprep.subr.mxu0 0.0
    %199 = vmatpush1.msra.mxu0 0.0
    %200 = vmatprep.subr.mxu0 0.0
    %201 = vmatpush1.msra.mxu0 0.0
    %202 = vmatprep.subr.mxu0 0.0
    %203 = vmatpush1.msra.mxu0 0.0
    %204 = vmatprep.subr.mxu0 0.0
    %205 = vmatpush1.msra.mxu0 0.0
    %206 = vmatprep.subr.mxu0 0.0
    %207 = vmatpush1.msra.mxu0 0.0
    %208 = vmatprep.subr.mxu0 0.0
    %209 = vmatpush1.msra.mxu0 0.0
    %210 = vmatprep.subr.mxu0 0.0
    %211 = vmatpush1.msra.mxu0 0.0
    %212 = vmatprep.subr.mxu0 0.0
    %213 = vmatpush1.msra.mxu0 0.0
    %214 = vmatprep.subr.mxu0 0.0
    %215 = vmatpush1.msra.mxu0 0.0
    %216 = vmatprep.subr.mxu0 0.0
    %217 = vmatpush1.msra.mxu0 %v172
    %218 = vmatprep.subr.mxu0 0.0
    %219 = vmatpush1.msra.mxu0 %v171
    %220 = vmatprep.subr.mxu0 0.0
    %221 = vmatpush1.msra.mxu0 %v170
    %222 = vmatprep.subr.mxu0 0.0
    %223 = vmatpush1.msra.mxu0 %v169
    %224 = vmatprep.subr.mxu0 0.0
    %225 = vmatpush2.msra.mxu0 0.0
    %226 = vmatprep.subr.mxu0 0.0
    %227 = vmatpush2.msra.mxu0 0.0
    %228 = vmatprep.subr.mxu0 0.0
    %229 = vmatpush2.msra.mxu0 0.0
    %230 = vmatprep.subr.mxu0 0.0
    %231 = vmatpush2.msra.mxu0 0.0
    %232 = vmatprep.subr.mxu0 0.0
    %233 = vmatpush2.msra.mxu0 0.0
    %234 = vmatprep.subr.mxu0 0.0
    %235 = vmatpush2.msra.mxu0 0.0
    %236 = vmatprep.subr.mxu0 0.0
    %237 = vmatpush2.msra.mxu0 0.0
    %238 = vmatprep.subr.mxu0 0.0
    %239 = vmatpush2.msra.mxu0 0.0
    %240 = vmatprep.subr.mxu0 0.0
    %241 = vmatpush2.msra.mxu0 0.0
    %242 = vmatprep.subr.mxu0 0.0
    %243 = vmatpush2.msra.mxu0 0.0
    %244 = vmatprep.subr.mxu0 0.0
    %245 = vmatpush2.msra.mxu0 0.0
    %246 = vmatprep.subr.mxu0 0.0
    %247 = vmatpush2.msra.mxu0 0.0
    %248 = vmatprep.subr.mxu0 0.0
    %249 = vmatpush2.msra.mxu0 0.0
    %250 = vmatprep.subr.mxu0 0.0
    %251 = vmatpush2.msra.mxu0 0.0
    %252 = vmatprep.subr.mxu0 0.0
    %253 = vmatpush2.msra.mxu0 0.0
    %254 = vmatprep.subr.mxu0 0.0
    %255 = vmatpush2.msra.mxu0 0.0
    %256 = vmatprep.mubr.f32.mxu0 0.0
    %257 = vmatmul.mubr.f32.gmra.mxu0 %v181
    %v258 = vpop.f32.mrf.mxu0
    %v259 = vadd.f32 %v178, %v258
    %v260 = vpop.f32.mrf.mxu0
    %261 = vmatprep.mubr.f32.mxu0 0.0
    %262 = vmatmul.mubr.f32.gmra.mxu0 %v184
    %v263 = vpop.f32.mrf.mxu0
    %v264 = vadd.f32 %v178, %v263
    %v265 = vpop.f32.mrf.mxu0
    %266 = vmatprep.mubr.f32.mxu0 0.0
    %267 = vmatmul.mubr.f32.gmra.mxu0 %v187
    %v268 = vpop.f32.mrf.mxu0
    %v269 = vadd.f32 %v178, %v268
    %v270 = vpop.f32.mrf.mxu0
    %271 = vmatprep.mubr.f32.mxu0 0.0
    %272 = vmatmul.mubr.f32.gmra.mxu0 %v190
    %v273 = vpop.f32.mrf.mxu0
    %v274 = vadd.f32 %v178, %v273
    %v275 = vpop.f32.mrf.mxu0
    %276 = vdwg.mxu0
    %v277 = vmax.f32 %v259, 0.0
    %v278 = vmax.f32 %v264, 0.0
    %v279 = vmax.f32 %v269, 0.0
    %v280 = vmax.f32 %v274, 0.0
    %v281 = vld [vmem:[%s6] sm:$0xff]
    %v282 = vld [vmem:[%s6 + $0x8] sm:$0xff]
    %v283 = vld [vmem:[%s7] sm:$0x1]
    %v285 = vlaneseq
    %v286 = vshrl.u32 %v285, 7
    %v287 = vsub.s32 0, %v286
    %v288 = vrot.slane %v283, %v287
    %vm290 = vcmask 130048
    %v292 = vsel %vm290, %v277, 0
    %v295 = vsel %vm290, %v278, 0
    %v298 = vsel %vm290, %v279, 0
    %v301 = vsel %vm290, %v280, 0
    %303 = vmatprep.subr.mxu0 0.0
    %304 = vmatpush1.msra.mxu0 0.0
    %305 = vmatprep.subr.mxu0 0.0
    %306 = vmatpush1.msra.mxu0 0.0
    %307 = vmatprep.subr.mxu0 0.0
    %308 = vmatpush1.msra.mxu0 0.0
    %309 = vmatprep.subr.mxu0 0.0
    %310 = vmatpush1.msra.mxu0 0.0
    %311 = vmatprep.subr.mxu0 0.0
    %312 = vmatpush1.msra.mxu0 0.0
    %313 = vmatprep.subr.mxu0 0.0
    %314 = vmatpush1.msra.mxu0 0.0
    %315 = vmatprep.subr.mxu0 0.0
    %316 = vmatpush1.msra.mxu0 0.0
    %317 = vmatprep.subr.mxu0 0.0
    %318 = vmatpush1.msra.mxu0 0.0
    %319 = vmatprep.subr.mxu0 0.0
    %320 = vmatpush1.msra.mxu0 0.0
    %321 = vmatprep.subr.mxu0 0.0
    %322 = vmatpush1.msra.mxu0 0.0
    %323 = vmatprep.subr.mxu0 0.0
    %324 = vmatpush1.msra.mxu0 0.0
    %325 = vmatprep.subr.mxu0 0.0
    %326 = vmatpush1.msra.mxu0 0.0
    %327 = vmatprep.subr.mxu0 0.0
    %328 = vmatpush1.msra.mxu0 0.0
    %329 = vmatprep.subr.mxu0 0.0
    %330 = vmatpush1.msra.mxu0 0.0
    %331 = vmatprep.subr.mxu0 0.0
    %332 = vmatpush1.msra.mxu0 %v282
    %333 = vmatprep.subr.mxu0 0.0
    %334 = vmatpush1.msra.mxu0 %v281
    %335 = vmatprep.subr.mxu0 0.0
    %336 = vmatpush2.msra.mxu0 0.0
    %337 = vmatprep.subr.mxu0 0.0
    %338 = vmatpush2.msra.mxu0 0.0
    %339 = vmatprep.subr.mxu0 0.0
    %340 = vmatpush2.msra.mxu0 0.0
    %341 = vmatprep.subr.mxu0 0.0
    %342 = vmatpush2.msra.mxu0 0.0
    %343 = vmatprep.subr.mxu0 0.0
    %344 = vmatpush2.msra.mxu0 0.0
    %345 = vmatprep.subr.mxu0 0.0
    %346 = vmatpush2.msra.mxu0 0.0
    %347 = vmatprep.subr.mxu0 0.0
    %348 = vmatpush2.msra.mxu0 0.0
    %349 = vmatprep.subr.mxu0 0.0
    %350 = vmatpush2.msra.mxu0 0.0
    %351 = vmatprep.subr.mxu0 0.0
    %352 = vmatpush2.msra.mxu0 0.0
    %353 = vmatprep.subr.mxu0 0.0
    %354 = vmatpush2.msra.mxu0 0.0
    %355 = vmatprep.subr.mxu0 0.0
    %356 = vmatpush2.msra.mxu0 0.0
    %357 = vmatprep.subr.mxu0 0.0
    %358 = vmatpush2.msra.mxu0 0.0
    %359 = vmatprep.subr.mxu0 0.0
    %360 = vmatpush2.msra.mxu0 0.0
    %361 = vmatprep.subr.mxu0 0.0
    %362 = vmatpush2.msra.mxu0 0.0
    %363 = vmatprep.subr.mxu0 0.0
    %364 = vmatpush2.msra.mxu0 0.0
    %365 = vmatprep.subr.mxu0 0.0
    %366 = vmatpush2.msra.mxu0 0.0
    %367 = vmatprep.mubr.f32.mxu0 0.0
    %368 = vmatmul.mubr.f32.gmra.mxu0 %v292
    %v369 = vpop.f32.mrf.mxu0
    %v370 = vadd.f32 %v288, %v369
    %v371 = vpop.f32.mrf.mxu0
    %372 = vmatprep.mubr.f32.mxu0 0.0
    %373 = vmatmul.mubr.f32.gmra.mxu0 %v295
    %v374 = vpop.f32.mrf.mxu0
    %v375 = vadd.f32 %v288, %v374
    %v376 = vpop.f32.mrf.mxu0
    %377 = vmatprep.mubr.f32.mxu0 0.0
    %378 = vmatmul.mubr.f32.gmra.mxu0 %v298
    %v379 = vpop.f32.mrf.mxu0
    %v380 = vadd.f32 %v288, %v379
    %v381 = vpop.f32.mrf.mxu0
    %382 = vmatprep.mubr.f32.mxu0 0.0
    %383 = vmatmul.mubr.f32.gmra.mxu0 %v301
    %v384 = vpop.f32.mrf.mxu0
    %v385 = vadd.f32 %v288, %v384
    %v386 = vpop.f32.mrf.mxu0
    %387 = vdwg.mxu0
    %v388 = vmax.f32 %v370, 0.0
    %v389 = vmax.f32 %v375, 0.0
    %v390 = vmax.f32 %v380, 0.0
    %v391 = vmax.f32 %v385, 0.0
    %v392 = vld [vmem:[%s8] sm:$0x1]
    %v394 = vlaneseq
    %v395 = vshrl.u32 %v394, 7
    %v396 = vsub.s32 0, %v395
    %v397 = vrot.slane %v392, %v396
    %v399 = vmul.f32 %v388, %v397
    %v400 = vmul.f32 %v389, %v397
    %v401 = vmul.f32 %v390, %v397
    %v402 = vmul.f32 %v391, %v397
    %vm403 = vcmask 64512
    %v404 = vsel %vm403, %v399, 0.0
    %405 = vadd.xlane.f32.xlu0 %v404
    %v406 = vpop.xlane.xlu0 %405
    %v407 = vsel %vm403, %v400, 0.0
    %408 = vadd.xlane.f32.xlu0 %v407
    %v409 = vpop.xlane.xlu0 %408
    %v410 = vsel %vm403, %v401, 0.0
    %411 = vadd.xlane.f32.xlu0 %v410
    %v412 = vpop.xlane.xlu0 %411
    %v413 = vsel %vm403, %v402, 0.0
    %414 = vadd.xlane.f32.xlu0 %v413
    %v415 = vpop.xlane.xlu0 %414
    %v416 = vld [vmem:[#allocation2] sm:$0x1]
    %v418 = vlaneseq
    %v419 = vshrl.u32 %v418, 7
    %v420 = vsub.s32 0, %v419
    %v421 = vrot.slane %v416, %v420
    %v423 = vadd.f32 %v406, %v421
    %v424 = vadd.f32 %v409, %v421
    %v425 = vadd.f32 %v412, %v421
    %v426 = vadd.f32 %v415, %v421
    %v427 = vsub.f32 %v423, %v425
    %v428 = vsub.f32 %v424, %v426
    %v429 = vxor.u32 %v427, 2147483648
    %v430 = vxor.u32 %v428, 2147483648
    %v431 = vmul.f32 %v429, 1.442695
    %v432 = vpow.pop %v431
    %v433 = vmul.f32 %v430, 1.442695
    %v434 = vpow.pop %v433
    %v435 = vadd.f32 %v432, 1.0
    %v436 = vadd.f32 %v434, 1.0
    %v437 = vrcp.pop %v435
    %v438 = vmul.f32 1.0, %v437
    %v439 = vrcp.pop %v436
    %v440 = vmul.f32 1.0, %v439
    %441 = vxpose.xlu0.b32.start [1/16] %v438, 128
    %442 = vxpose.xlu0.b32.cont [2/16] %v440, 128
    %443 = vxpose.xlu0.b32.cont [3/16] 0.0, 128
    %444 = vxpose.xlu0.b32.cont [4/16] 0.0, 128
    %445 = vxpose.xlu0.b32.cont [5/16] 0.0, 128
    %446 = vxpose.xlu0.b32.cont [6/16] 0.0, 128
    %447 = vxpose.xlu0.b32.cont [7/16] 0.0, 128
    %448 = vxpose.xlu0.b32.cont [8/16] 0.0, 128
    %449 = vxpose.xlu0.b32.cont [9/16] 0.0, 128
    %450 = vxpose.xlu0.b32.cont [10/16] 0.0, 128
    %451 = vxpose.xlu0.b32.cont [11/16] 0.0, 128
    %452 = vxpose.xlu0.b32.cont [12/16] 0.0, 128
    %453 = vxpose.xlu0.b32.cont [13/16] 0.0, 128
    %454 = vxpose.xlu0.b32.cont [14/16] 0.0, 128
    %455 = vxpose.xlu0.b32.cont [15/16] 0.0, 128
    %456 = vxpose.xlu0.b32.end [16/16] 0.0, 128
    %v457 = vpop.trf.xlu0
    %v458 = vpop.trf.xlu0
    %v459 = vpop.trf.xlu0
    %v460 = vpop.trf.xlu0
    %v461 = vpop.trf.xlu0
    %v462 = vpop.trf.xlu0
    %v463 = vpop.trf.xlu0
    %v464 = vpop.trf.xlu0
    %v465 = vpop.trf.xlu0
    %v466 = vpop.trf.xlu0
    %v467 = vpop.trf.xlu0
    %v468 = vpop.trf.xlu0
    %v469 = vpop.trf.xlu0
    %v470 = vpop.trf.xlu0
    %v471 = vpop.trf.xlu0
    %v472 = vpop.trf.xlu0
    %vm473 = vcmask 122880
    %474 = vst.msk [vmem:[#allocation6] sm:$0x1] %vm473, %v457
    // Predicated region
    $region46: #{tpu_custom_call.1} parent=1 // pred_check
      _
    $region47: #{tpu_custom_call.1} parent=1 // pred_check_branch
      %476 = sbr.rel (0) target = $region49
    $region48: #{tpu_custom_call.1} parent=1 // pred_region
      %s478 = ssub.s32 16, 16
      %479 = vsyncadd [#allocation5], %s478
      %s481 = sshll.u32 [#allocation6], 4
      %s482 = int_to_ptr.vmem [resolvable:$true] %s481
      %484 = dma.vmem_to_hbm [thread:$0]  %s482, 16, %s10, [#allocation5]
    $region49: #{tpu_custom_call.1} parent=1 // pred_fallthru
      _
    // Predicated region
    $region50: #{tpu_custom_call.1} parent=1 // pred_check
      _
    $region51: #{tpu_custom_call.1} parent=1 // pred_check_branch
      %486 = sbr.rel (0) target = $region53
    $region52: #{tpu_custom_call.1} parent=1 // pred_region
      %487 = dma.done [#allocation5], 16
    $region53: #{tpu_custom_call.1} parent=1 // pred_fallthru
      _
    %488 = vsyncpa [#allocation4], 1
    %489 = vsyncpa [#allocation5], 1

</llo_original>
